<compile_context>
chip_gen: v5e
topology: v5e:2x2
jax: 0.10.0
libtpu: 0.0.40
codegen_flags: <defaults>
</compile_context>

<pallas_src>
import jax
import jax.numpy as jnp
from jax.experimental import pallas as pl
from jax.experimental.pallas import tpu as pltpu

_LANES = 128     # vreg lane width
_SUBLANES = 8    # f32 sublanes per vreg tile


def _poly_kernel(abc_ref, x_ref, o_ref):
    # abc_ref: SMEM (3,) scalars [a, b, c]
    # x_ref / o_ref: VMEM (rows, 128) lane-dense slabs, rows % 8 == 0
    a = abc_ref[0]
    b = abc_ref[1]
    c = abc_ref[2]
    xv = x_ref[...]
    # Horner form: a + x*(b + c*x)
    o_ref[...] = a + xv * (b + c * xv)


@jax.jit
def quadratic_model(x, a, b, c):
    """Pallas equivalent of the PyTorch forward: a + b*x + c*x**2."""
    orig_shape = x.shape
    x = x.astype(jnp.float32)

    # Single (3,) scalar operand; the concat is folded under jit.
    abc = jnp.concatenate(
        [a.reshape(-1), b.reshape(-1), c.reshape(-1)]
    ).astype(jnp.float32)

    # Present the data lane-dense: flatten, pad to a full (8, 128) tile
    # multiple, reshape to (rows, 128). Padded tail sliced off afterwards.
    n = x.size
    flat = x.reshape(-1)
    rows = max(1, pl.cdiv(n, _LANES))
    rows = pl.cdiv(rows, _SUBLANES) * _SUBLANES     # round sublanes up to 8
    padded = rows * _LANES
    if padded != n:
        flat = jnp.pad(flat, (0, padded - n))
    slab = flat.reshape(rows, _LANES)

    out_slab = pl.pallas_call(
        _poly_kernel,
        out_shape=jax.ShapeDtypeStruct((rows, _LANES), jnp.float32),
        in_specs=[
            pl.BlockSpec(memory_space=pltpu.SMEM),   # abc scalars
            pl.BlockSpec(memory_space=pltpu.VMEM),   # x slab, full block
        ],
        out_specs=pl.BlockSpec(memory_space=pltpu.VMEM),
    )(abc, slab)

    # Drop padded elements before returning to the caller-visible shape.
    return out_slab.reshape(-1)[:n].reshape(orig_shape)


if __name__ == "__main__":
    key = jax.random.PRNGKey(0)
    kx, ka, kb, kc = jax.random.split(key, 4)

    # Input consistent with the module: x of shape (400, 1)
    x = jax.random.uniform(kx, (400, 1), dtype=jnp.float32)

    # Deterministic "randn"-style parameters, shape (1,) like nn.Parameter(torch.randn(1))
    a = jax.random.normal(ka, (1,), dtype=jnp.float32)
    b = jax.random.normal(kb, (1,), dtype=jnp.float32)
    c = jax.random.normal(kc, (1,), dtype=jnp.float32)

    out = quadratic_model(x, a, b, c)
    jax.block_until_ready(out)

    # Reference check in plain JAX (same semantics as the PyTorch forward)
    ref = a + b * x + c * x ** 2
    assert out.shape == x.shape
    assert jnp.allclose(out, ref, atol=1e-6), "mismatch vs reference"

    print("KERNEL_OK")
</pallas_src>

<mosaic_0001>
module attributes {stable_mosaic.version = 11 : i64} {
  func.func @_poly_kernel(%arg0: memref<3xf32, #tpu.memory_space<smem>>, %arg1: memref<8x128xf32, #tpu.memory_space<vmem>>, %arg2: memref<8x128xf32, #tpu.memory_space<vmem>>) attributes {dimension_semantics = [], scalar_prefetch = 0 : i64, scratch_operands = 0 : i64, tpu.core_type = #tpu.core_type<tc>} {
    %c0 = arith.constant 0 : index
    %0 = memref.load %arg0[%c0] : memref<3xf32, #tpu.memory_space<smem>>
    %c1 = arith.constant 1 : index
    %1 = memref.load %arg0[%c1] : memref<3xf32, #tpu.memory_space<smem>>
    %c2 = arith.constant 2 : index
    %2 = memref.load %arg0[%c2] : memref<3xf32, #tpu.memory_space<smem>>
    %c0_0 = arith.constant 0 : index
    %c0_1 = arith.constant 0 : index
    %3 = vector.load %arg1[%c0_0, %c0_1] : memref<8x128xf32, #tpu.memory_space<vmem>>, vector<8x128xf32>
    %4 = vector.broadcast %2 : f32 to vector<8x128xf32>
    %5 = arith.mulf %4, %3 : vector<8x128xf32>
    %6 = vector.broadcast %1 : f32 to vector<8x128xf32>
    %7 = arith.addf %6, %5 : vector<8x128xf32>
    %8 = arith.mulf %3, %7 : vector<8x128xf32>
    %9 = vector.broadcast %0 : f32 to vector<8x128xf32>
    %10 = arith.addf %9, %8 : vector<8x128xf32>
    %c0_2 = arith.constant 0 : index
    %c0_3 = arith.constant 0 : index
    %11 = vector.load %arg2[%c0_2, %c0_3] : memref<8x128xf32, #tpu.memory_space<vmem>>, vector<8x128xf32>
    tpu.vector_store %arg2[%c0_2, %c0_3], %10 {strides = array<i32>} : memref<8x128xf32, #tpu.memory_space<vmem>>, vector<8x128xf32>,
    return
  }
}

</mosaic_0001>

<llo_original>
// kernel: quadratic_model.1
$region0: #{quadratic_model.1}
  #allocation0 [shape = 'u32[]', space=smem, size = 0x4, offset = 0x4, fixed_abs, tag = 'smem constant byte address 0x4 - core index']
  #allocation1 [shape = 'u32[72,128]{1,0:T(1,128)}', space=vmem, size = 0x9000, scoped, tag = 'internal scratch']
  %s0 = inlined_call_operand.vmem [shape: f32[3], index: 0, kind: input, shape index: {}]
  %s1 = inlined_call_operand.vmem [shape: f32[8,128], index: 1, kind: input, shape index: {}]
  %s2 = inlined_call_operand.vmem [shape: f32[8,128], index: 2, kind: output, shape index: {}]
  %s3 = sld [smem:[#allocation0]]
  $region22: #{quadratic_model.1} parent=0
    _
  %s5 = ssub.s32 1, %s3
  %s6 = scalar_select 0, %s5, %s3
  $region1: #{quadratic_model.1} parent=0
    #allocation2 [shape = 'u8[512]{0}', space=smem, size = 0x200, scoped, tag = 'input window, operand 0, single buffered']
    #allocation3 [shape = 's32[1]{0}', space=sflag, size = 0x4, scoped, tag = 'scoped memory for quadratic_model.1']
    %7 = vsyncpa [#allocation3], 0
    // Predicated region
    $region2: #{quadratic_model.1} parent=1 // pred_check
      _
    $region3: #{quadratic_model.1} parent=1 // pred_check_branch
      %9 = sbr.rel (0) target = $region5
    $region4: #{quadratic_model.1} parent=1 // pred_region
      %11 = vsyncadd [#allocation3], 0
      %s13 = sshll.u32 %s0, 4
      %s14 = int_to_ptr.vmem [resolvable:$true] %s13
      %16 = dma.vmem_to_smem %s14, 16, [#allocation2], [#allocation3]
    $region5: #{quadratic_model.1} parent=1 // pred_fallthru
      _
    // Predicated region
    $region6: #{quadratic_model.1} parent=1 // pred_check
      _
    $region7: #{quadratic_model.1} parent=1 // pred_check_branch
      %18 = sbr.rel (0) target = $region9
    $region8: #{quadratic_model.1} parent=1 // pred_region
      _
    $region9: #{quadratic_model.1} parent=1 // pred_fallthru
      _
    // Predicated region
    $region10: #{quadratic_model.1} parent=1 // pred_check
      _
    $region11: #{quadratic_model.1} parent=1 // pred_check_branch
      %20 = sbr.rel (0) target = $region13
    $region12: #{quadratic_model.1} parent=1 // pred_region
      %22 = dma.done [#allocation3], 16
    $region13: #{quadratic_model.1} parent=1 // pred_fallthru
      _
    %23 = sfence
    %s24 = sld [smem:[#allocation2]]
    %s25 = sld [smem:[#allocation2 + $0x1]]
    %s26 = sld [smem:[#allocation2 + $0x2]]
    %v27 = vld [vmem:[%s1] sm:$0xff]
    %v28 = vstv %s26
    %v29 = vmul.f32 %v28, %v27
    %v30 = vstv %s25
    %v31 = vadd.f32 %v30, %v29
    %v32 = vmul.f32 %v27, %v31
    %v33 = vstv %s24
    %v34 = vadd.f32 %v33, %v32
    %35 = vst [vmem:[%s2] sm:$0xff] %v34
    // Predicated region
    $region14: #{quadratic_model.1} parent=1 // pred_check
      _
    $region15: #{quadratic_model.1} parent=1 // pred_check_branch
      %37 = sbr.rel (0) target = $region17
    $region16: #{quadratic_model.1} parent=1 // pred_region
      _
    $region17: #{quadratic_model.1} parent=1 // pred_fallthru
      _
    // Predicated region
    $region18: #{quadratic_model.1} parent=1 // pred_check
      _
    $region19: #{quadratic_model.1} parent=1 // pred_check_branch
      %39 = sbr.rel (0) target = $region21
    $region20: #{quadratic_model.1} parent=1 // pred_region
      _
    $region21: #{quadratic_model.1} parent=1 // pred_fallthru
      _
    %40 = vsyncpa [#allocation3], 1

</llo_original>
